<compile_context>
chip_gen: v7x
topology: tpu7x:2x2x1
jax: 0.10.0
libtpu: 0.0.40
codegen_flags: <defaults>
</compile_context>

<pallas_src>
import jax
import jax.numpy as jnp
from jax.experimental import pallas as pl
from jax.experimental.pallas import tpu as pltpu


def soft_q_kernel(state_ref, action_ref, w1s_ref, w1a_ref, b1_ref,
                  w2_ref, b2_ref, w3_ref, b3_ref, o_ref):
    """One batch tile of: relu(L1(cat(s,a))) -> relu(L2) -> L3 (scalar head)."""
    # linear1 with the concat fused away: cat(s,a) @ W1 == s @ W1_s + a @ W1_a
    h1 = jnp.dot(state_ref[...], w1s_ref[...], preferred_element_type=jnp.float32)
    h1 = h1 + jnp.dot(action_ref[...], w1a_ref[...],
                      preferred_element_type=jnp.float32)
    h1 = jnp.maximum(h1 + b1_ref[...], 0.0)                        # ReLU, f32

    # linear2 (activation cast to weight dtype: no-op for f32, bf16 on fast path)
    h2 = jnp.dot(h1.astype(w2_ref.dtype), w2_ref[...],
                 preferred_element_type=jnp.float32)
    h2 = jnp.maximum(h2 + b2_ref[...], 0.0)                        # ReLU, f32

    # linear3: (tm, l2) @ (l2, 1) on the MXU -> lands directly in the natural
    # (tm, 1) output layout (no sublane->lane transpose).  Bias is an SMEM scalar.
    q = jnp.dot(h2.astype(w3_ref.dtype), w3_ref[...],
                preferred_element_type=jnp.float32)                # (tm, 1)
    o_ref[...] = (q + b3_ref[0]).astype(o_ref.dtype)


def soft_q_forward(state, action, params, *, block_b=4096, use_bf16=True,
                   core_parallel=False):
    """Fused SoftQNetwork forward. Returns (B, 1) f32 Q-values.

    block_b: batch rows per grid step (large tiles amortize per-step overhead).
    use_bf16: cast matmul inputs to bf16 (f32 accumulation); PyTorch-exact math
              requires use_bf16=False.
    core_parallel: mark the batch axis CORE_PARALLEL (use on v7x, 2 TCs/chip).
    """
    w1, b1, w2, b2, w3, b3 = params
    B, state_dim = state.shape
    action_dim = action.shape[1]
    l1 = w1.shape[1]
    l2 = w2.shape[1]

    mm_dtype = jnp.bfloat16 if use_bf16 else jnp.float32
    # Split W1 so the concat happens inside the kernel; L3 as (l2, 1) column.
    w1_s = w1[:state_dim, :].astype(mm_dtype)
    w1_a = w1[state_dim:, :].astype(mm_dtype)
    w2_c = w2.astype(mm_dtype)
    w3_c = w3.reshape(l2, 1).astype(mm_dtype)
    b1_c = b1.reshape(1, l1).astype(jnp.float32)
    b2_c = b2.reshape(1, l2).astype(jnp.float32)
    b3_s = b3.reshape(1).astype(jnp.float32)
    state_c = state.astype(mm_dtype)
    action_c = action.astype(mm_dtype)

    # Batch tiling WITHOUT a wrapper-side pad (that was a full extra HBM pass):
    # a ragged last tile is handled by Pallas edge masking -- out-of-bounds input
    # rows only produce out-of-bounds output rows, which are discarded on store.
    granule = 16 if use_bf16 else 8          # bf16 packs 2 rows per sublane
    if B <= block_b:
        tm = B                               # single tile == full batch dim
    else:
        tm = max(granule, (block_b // granule) * granule)
    num_tiles = pl.cdiv(B, tm)

    dims = (pltpu.CORE_PARALLEL,) if core_parallel else (pltpu.PARALLEL,)
    const = lambda shape: pl.BlockSpec(shape, lambda i: (0, 0))

    out = pl.pallas_call(
        soft_q_kernel,
        out_shape=jax.ShapeDtypeStruct((B, 1), jnp.float32),
        grid=(num_tiles,),
        in_specs=[
            pl.BlockSpec((tm, state_dim), lambda i: (i, 0)),    # state tile
            pl.BlockSpec((tm, action_dim), lambda i: (i, 0)),   # action tile
            const((state_dim, l1)),                             # W1_s (resident)
            const((action_dim, l1)),                            # W1_a (resident)
            const((1, l1)),                                     # b1
            const((l1, l2)),                                    # W2
            const((1, l2)),                                     # b2
            const((l2, 1)),                                     # w3 column
            pl.BlockSpec(memory_space=pltpu.MemorySpace.SMEM),  # b3 scalar
        ],
        out_specs=pl.BlockSpec((tm, 1), lambda i: (i, 0)),      # natural layout
        compiler_params=pltpu.CompilerParams(
            dimension_semantics=dims,
            # Large batch tiles need more than v5e's 16 MiB default scoped VMEM;
            # 48 MiB fits comfortably under every generation's physical VMEM.
            vmem_limit_bytes=48 * 1024 * 1024),
    )(state_c, action_c, w1_s, w1_a, b1_c, w2_c, b2_c, w3_c, b3_s)
    return out


def init_params(key, state_dim, action_dim, l1_dim, l2_dim, init_w=0.003):
    """Matches PyTorch shapes/init: Linear default U(+-1/sqrt(fan_in)); linear3
    U(+-init_w).  Weights stored transposed vs. PyTorch: (in_features, out_features)."""
    ks = jax.random.split(key, 6)
    in_dim = state_dim + action_dim

    def lin(kw, kb, fan_in, fan_out):
        bound = 1.0 / jnp.sqrt(jnp.float32(fan_in))
        w = jax.random.uniform(kw, (fan_in, fan_out), jnp.float32, -bound, bound)
        b = jax.random.uniform(kb, (1, fan_out), jnp.float32, -bound, bound)
        return w, b

    w1, b1 = lin(ks[0], ks[1], in_dim, l1_dim)
    w2, b2 = lin(ks[2], ks[3], l1_dim, l2_dim)
    w3 = jax.random.uniform(ks[4], (l2_dim, 1), jnp.float32, -init_w, init_w)
    b3 = jax.random.uniform(ks[5], (1, 1), jnp.float32, -init_w, init_w)
    return (w1, b1, w2, b2, w3, b3)


if __name__ == "__main__":
    key = jax.random.PRNGKey(0)
    k_state, k_action, k_params, k2, k3 = jax.random.split(key, 5)

    state_dim, action_dim = 8, 4
    l1_dim, l2_dim = 32, 32
    params = init_params(k_params, state_dim, action_dim, l1_dim, l2_dim)

    def ref_forward(s, a, p):
        w1, b1, w2, b2, w3, b3 = p
        x = jnp.concatenate([s, a], axis=1)
        h = jnp.maximum(x @ w1 + b1, 0.0)
        h = jnp.maximum(h @ w2 + b2, 0.0)
        return h @ w3 + b3

    # 1) tiny batch, f32 path, single tile (PyTorch-exact semantics)
    B = 2
    s = jax.random.normal(k_state, (B, state_dim), jnp.float32)
    a = jax.random.normal(k_action, (B, action_dim), jnp.float32)
    q = soft_q_forward(s, a, params, use_bf16=False)
    jax.block_until_ready(q)
    assert q.shape == (B, 1)
    assert jnp.allclose(q, ref_forward(s, a, params), atol=1e-5, rtol=1e-5)

    # 2) ragged multi-tile, f32 (exercises the no-pad edge-masked last block)
    B = 19
    ks, ka = jax.random.split(k2)
    s = jax.random.normal(ks, (B, state_dim), jnp.float32)
    a = jax.random.normal(ka, (B, action_dim), jnp.float32)
    q = soft_q_forward(s, a, params, block_b=8, use_bf16=False)
    jax.block_until_ready(q)
    assert q.shape == (B, 1)
    assert jnp.allclose(q, ref_forward(s, a, params), atol=1e-5, rtol=1e-5)

    # 3) bf16 fast path (NOTE: deviates from PyTorch f32 matmul semantics by
    #    design -- f32 accumulation, loose tolerance), even multi-tile
    B = 64
    ks, ka = jax.random.split(k3)
    s = jax.random.normal(ks, (B, state_dim), jnp.float32)
    a = jax.random.normal(ka, (B, action_dim), jnp.float32)
    q = soft_q_forward(s, a, params, block_b=16, use_bf16=True)
    jax.block_until_ready(q)
    assert q.shape == (B, 1)
    assert jnp.allclose(q, ref_forward(s, a, params), atol=5e-2, rtol=5e-2)

    # 4) bf16 ragged tail (tm=16 multiple of the bf16 packing granule)
    B = 50
    q = soft_q_forward(s[:B], a[:B], params, block_b=16, use_bf16=True)
    jax.block_until_ready(q)
    assert q.shape == (B, 1)
    assert jnp.allclose(q, ref_forward(s[:B], a[:B], params), atol=5e-2, rtol=5e-2)

    print("KERNEL_OK")
</pallas_src>

<mosaic_0001>
module attributes {stable_mosaic.version = 11 : i64} {
  func.func @soft_q_kernel(%arg0: i32, %arg1: memref<2x8xf32, #tpu.memory_space<vmem>>, %arg2: memref<2x4xf32, #tpu.memory_space<vmem>>, %arg3: memref<8x32xf32, #tpu.memory_space<vmem>>, %arg4: memref<4x32xf32, #tpu.memory_space<vmem>>, %arg5: memref<1x32xf32, #tpu.memory_space<vmem>>, %arg6: memref<32x32xf32, #tpu.memory_space<vmem>>, %arg7: memref<1x32xf32, #tpu.memory_space<vmem>>, %arg8: memref<32x1xf32, #tpu.memory_space<vmem>>, %arg9: memref<1xf32, #tpu.memory_space<smem>>, %arg10: memref<2x1xf32, #tpu.memory_space<vmem>>) attributes {dimension_semantics = [#tpu.dimension_semantics<parallel>], iteration_bounds = array<i64: 1>, scalar_prefetch = 0 : i64, scratch_operands = 0 : i64, tpu.core_type = #tpu.core_type<tc>, window_params = [{transform_indices = @transform_0, window_bounds = array<i64: 2, 8>}, {transform_indices = @transform_1, window_bounds = array<i64: 2, 4>}, {pipeline_mode = #tpu.pipeline_mode<synchronous>, transform_indices = @transform_2, window_bounds = array<i64: 8, 32>}, {pipeline_mode = #tpu.pipeline_mode<synchronous>, transform_indices = @transform_3, window_bounds = array<i64: 4, 32>}, {pipeline_mode = #tpu.pipeline_mode<synchronous>, transform_indices = @transform_4, window_bounds = array<i64: 1, 32>}, {pipeline_mode = #tpu.pipeline_mode<synchronous>, transform_indices = @transform_5, window_bounds = array<i64: 32, 32>}, {pipeline_mode = #tpu.pipeline_mode<synchronous>, transform_indices = @transform_6, window_bounds = array<i64: 1, 32>}, {pipeline_mode = #tpu.pipeline_mode<synchronous>, transform_indices = @transform_7, window_bounds = array<i64: 32, 1>}, {transform_indices = @transform_8, window_bounds = array<i64: 1>}, {transform_indices = @transform_9, window_bounds = array<i64: 2, 1>}]} {
    %c0 = arith.constant 0 : index
    %c0_0 = arith.constant 0 : index
    %0 = vector.load %arg1[%c0, %c0_0] : memref<2x8xf32, #tpu.memory_space<vmem>>, vector<2x8xf32>
    %c0_1 = arith.constant 0 : index
    %c0_2 = arith.constant 0 : index
    %1 = vector.load %arg3[%c0_1, %c0_2] : memref<8x32xf32, #tpu.memory_space<vmem>>, vector<8x32xf32>
    %cst = arith.constant dense<0.000000e+00> : vector<2x32xf32>
    %2 = tpu.matmul %0, %1, %cst {dimension_numbers = #tpu.dot_dimension_numbers<[1], [0], [0], [1], [0, 0, 1, 1], [], []>} : vector<2x8xf32>, vector<8x32xf32>, vector<2x32xf32> -> vector<2x32xf32>
    %c0_3 = arith.constant 0 : index
    %c0_4 = arith.constant 0 : index
    %3 = vector.load %arg2[%c0_3, %c0_4] : memref<2x4xf32, #tpu.memory_space<vmem>>, vector<2x4xf32>
    %c0_5 = arith.constant 0 : index
    %c0_6 = arith.constant 0 : index
    %4 = vector.load %arg4[%c0_5, %c0_6] : memref<4x32xf32, #tpu.memory_space<vmem>>, vector<4x32xf32>
    %cst_7 = arith.constant dense<0.000000e+00> : vector<2x32xf32>
    %5 = tpu.matmul %3, %4, %cst_7 {dimension_numbers = #tpu.dot_dimension_numbers<[1], [0], [0], [1], [0, 0, 1, 1], [], []>} : vector<2x4xf32>, vector<4x32xf32>, vector<2x32xf32> -> vector<2x32xf32>
    %6 = arith.addf %2, %5 : vector<2x32xf32>
    %c0_8 = arith.constant 0 : index
    %c0_9 = arith.constant 0 : index
    %7 = vector.load %arg5[%c0_8, %c0_9] : memref<1x32xf32, #tpu.memory_space<vmem>>, vector<1x32xf32>
    %8 = vector.broadcast %7 : vector<1x32xf32> to vector<2x32xf32>
    %9 = arith.addf %6, %8 : vector<2x32xf32>
    %cst_10 = arith.constant 0.000000e+00 : f32
    %10 = vector.broadcast %cst_10 : f32 to vector<2x32xf32>
    %11 = arith.maximumf %9, %10 : vector<2x32xf32>
    %c0_11 = arith.constant 0 : index
    %c0_12 = arith.constant 0 : index
    %12 = vector.load %arg6[%c0_11, %c0_12] : memref<32x32xf32, #tpu.memory_space<vmem>>, vector<32x32xf32>
    %cst_13 = arith.constant dense<0.000000e+00> : vector<2x32xf32>
    %13 = tpu.matmul %11, %12, %cst_13 {dimension_numbers = #tpu.dot_dimension_numbers<[1], [0], [0], [1], [0, 0, 1, 1], [], []>} : vector<2x32xf32>, vector<32x32xf32>, vector<2x32xf32> -> vector<2x32xf32>
    %c0_14 = arith.constant 0 : index
    %c0_15 = arith.constant 0 : index
    %14 = vector.load %arg7[%c0_14, %c0_15] : memref<1x32xf32, #tpu.memory_space<vmem>>, vector<1x32xf32>
    %15 = vector.broadcast %14 : vector<1x32xf32> to vector<2x32xf32>
    %16 = arith.addf %13, %15 : vector<2x32xf32>
    %cst_16 = arith.constant 0.000000e+00 : f32
    %17 = vector.broadcast %cst_16 : f32 to vector<2x32xf32>
    %18 = arith.maximumf %16, %17 : vector<2x32xf32>
    %c0_17 = arith.constant 0 : index
    %c0_18 = arith.constant 0 : index
    %19 = vector.load %arg8[%c0_17, %c0_18] : memref<32x1xf32, #tpu.memory_space<vmem>>, vector<32x1xf32>
    %cst_19 = arith.constant dense<0.000000e+00> : vector<2x1xf32>
    %20 = tpu.matmul %18, %19, %cst_19 {dimension_numbers = #tpu.dot_dimension_numbers<[1], [0], [0], [1], [0, 0, 1, 1], [], []>} : vector<2x32xf32>, vector<32x1xf32>, vector<2x1xf32> -> vector<2x1xf32>
    %c0_20 = arith.constant 0 : index
    %21 = memref.load %arg9[%c0_20] : memref<1xf32, #tpu.memory_space<smem>>
    %22 = vector.broadcast %21 : f32 to vector<2x1xf32>
    %23 = arith.addf %20, %22 : vector<2x1xf32>
    %c0_21 = arith.constant 0 : index
    %c0_22 = arith.constant 0 : index
    %24 = vector.load %arg10[%c0_21, %c0_22] : memref<2x1xf32, #tpu.memory_space<vmem>>, vector<2x1xf32>
    tpu.vector_store %arg10[%c0_21, %c0_22], %23 {strides = array<i32>} : memref<2x1xf32, #tpu.memory_space<vmem>>, vector<2x1xf32>,
    return
  }
  func.func @transform_0(%arg0: i32) -> (i32, i32) {
    %c0_i32 = arith.constant 0 : i32
    %c0_i32_0 = arith.constant 0 : i32
    return %arg0, %c0_i32 : i32, i32
  }
  func.func @transform_1(%arg0: i32) -> (i32, i32) {
    %c0_i32 = arith.constant 0 : i32
    %c0_i32_0 = arith.constant 0 : i32
    return %arg0, %c0_i32 : i32, i32
  }
  func.func @transform_2(%arg0: i32) -> (i32, i32) {
    %c0_i32 = arith.constant 0 : i32
    %c0_i32_0 = arith.constant 0 : i32
    %c0_i32_1 = arith.constant 0 : i32
    return %c0_i32, %c0_i32_0 : i32, i32
  }
  func.func @transform_3(%arg0: i32) -> (i32, i32) {
    %c0_i32 = arith.constant 0 : i32
    %c0_i32_0 = arith.constant 0 : i32
    %c0_i32_1 = arith.constant 0 : i32
    return %c0_i32, %c0_i32_0 : i32, i32
  }
  func.func @transform_4(%arg0: i32) -> (i32, i32) {
    %c0_i32 = arith.constant 0 : i32
    %c0_i32_0 = arith.constant 0 : i32
    %c0_i32_1 = arith.constant 0 : i32
    return %c0_i32, %c0_i32_0 : i32, i32
  }
  func.func @transform_5(%arg0: i32) -> (i32, i32) {
    %c0_i32 = arith.constant 0 : i32
    %c0_i32_0 = arith.constant 0 : i32
    %c0_i32_1 = arith.constant 0 : i32
    return %c0_i32, %c0_i32_0 : i32, i32
  }
  func.func @transform_6(%arg0: i32) -> (i32, i32) {
    %c0_i32 = arith.constant 0 : i32
    %c0_i32_0 = arith.constant 0 : i32
    %c0_i32_1 = arith.constant 0 : i32
    return %c0_i32, %c0_i32_0 : i32, i32
  }
  func.func @transform_7(%arg0: i32) -> (i32, i32) {
    %c0_i32 = arith.constant 0 : i32
    %c0_i32_0 = arith.constant 0 : i32
    %c0_i32_1 = arith.constant 0 : i32
    return %c0_i32, %c0_i32_0 : i32, i32
  }
  func.func @transform_8(%arg0: i32) -> i32 {
    %c0_i32 = arith.constant 0 : i32
    %c0_i32_0 = arith.constant 0 : i32
    return %c0_i32 : i32
  }
  func.func @transform_9(%arg0: i32) -> (i32, i32) {
    %c0_i32 = arith.constant 0 : i32
    %c0_i32_0 = arith.constant 0 : i32
    return %arg0, %c0_i32 : i32, i32
  }
}

</mosaic_0001>

<llo_original>
// kernel: tpu_custom_call.1
$region0: #{tpu_custom_call.1}
  #allocation0 [shape = 'u32[]', space=smem, size = 0x4, offset = 0x4, fixed_abs, tag = 'smem constant byte address 0x4 - core index']
  #allocation1 [shape = 'u32[144,128]{1,0:T(1,128)}', space=vmem, size = 0x12000, scoped, tag = 'internal scratch']
  #allocation2 [shape = 'f32[1]{0:T(128)S(6)}', space=smem, size = 0x200, scoped, tag = 'scoped memory for tpu_custom_call.1']
  %s0 = inlined_call_operand.vmem [shape: f32[2,8], index: 0, kind: input, shape index: {}]
  %s1 = inlined_call_operand.vmem [shape: f32[2,4], index: 1, kind: input, shape index: {}]
  %s2 = inlined_call_operand.vmem [shape: f32[8,32], index: 2, kind: input, shape index: {}]
  %s3 = inlined_call_operand.vmem [shape: f32[4,32], index: 3, kind: input, shape index: {}]
  %s4 = inlined_call_operand.vmem [shape: f32[1,32], index: 4, kind: input, shape index: {}]
  %s5 = inlined_call_operand.vmem [shape: f32[32,32], index: 5, kind: input, shape index: {}]
  %s6 = inlined_call_operand.vmem [shape: f32[1,32], index: 6, kind: input, shape index: {}]
  %s7 = inlined_call_operand.vmem [shape: f32[32,1], index: 7, kind: input, shape index: {}]
  %s8 = inlined_call_operand.<no memory space> [shape: f32[1], index: 8, kind: input, shape index: {}]
  %s9 = inlined_call_operand.vmem [shape: f32[2,1], index: 9, kind: output, shape index: {}]
  %s10 = sld [smem:[#allocation0]]
  $region46: #{tpu_custom_call.1} parent=0
    _
  %s12 = ssub.s32 1, %s10
  %s13 = scalar_select 0, %s12, %s10
  %14 = sst [smem:[#allocation2]] %s8
  // Predicated region
  $region2: #{tpu_custom_call.1} parent=0 // pred_check
    _
  $region3: #{tpu_custom_call.1} parent=0 // pred_check_branch
    %16 = sbr.rel (0) target = $region5
  $region4: #{tpu_custom_call.1} parent=0 // pred_region
    _
  $region5: #{tpu_custom_call.1} parent=0 // pred_fallthru
    _
  // Predicated region
  $region6: #{tpu_custom_call.1} parent=0 // pred_check
    _
  $region7: #{tpu_custom_call.1} parent=0 // pred_check_branch
    %18 = sbr.rel (0) target = $region9
  $region8: #{tpu_custom_call.1} parent=0 // pred_region
    _
  $region9: #{tpu_custom_call.1} parent=0 // pred_fallthru
    _
  // Predicated region
  $region10: #{tpu_custom_call.1} parent=0 // pred_check
    _
  $region11: #{tpu_custom_call.1} parent=0 // pred_check_branch
    %20 = sbr.rel (0) target = $region13
  $region12: #{tpu_custom_call.1} parent=0 // pred_region
    _
  $region13: #{tpu_custom_call.1} parent=0 // pred_fallthru
    _
  // Predicated region
  $region14: #{tpu_custom_call.1} parent=0 // pred_check
    _
  $region15: #{tpu_custom_call.1} parent=0 // pred_check_branch
    %22 = sbr.rel (0) target = $region17
  $region16: #{tpu_custom_call.1} parent=0 // pred_region
    _
  $region17: #{tpu_custom_call.1} parent=0 // pred_fallthru
    _
  // Predicated region
  $region18: #{tpu_custom_call.1} parent=0 // pred_check
    _
  $region19: #{tpu_custom_call.1} parent=0 // pred_check_branch
    %24 = sbr.rel (0) target = $region21
  $region20: #{tpu_custom_call.1} parent=0 // pred_region
    _
  $region21: #{tpu_custom_call.1} parent=0 // pred_fallthru
    _
  // Predicated region
  $region22: #{tpu_custom_call.1} parent=0 // pred_check
    _
  $region23: #{tpu_custom_call.1} parent=0 // pred_check_branch
    %26 = sbr.rel (0) target = $region25
  $region24: #{tpu_custom_call.1} parent=0 // pred_region
    _
  $region25: #{tpu_custom_call.1} parent=0 // pred_fallthru
    _
  // Predicated region
  $region26: #{tpu_custom_call.1} parent=0 // pred_check
    _
  $region27: #{tpu_custom_call.1} parent=0 // pred_check_branch
    %28 = sbr.rel (0) target = $region29
  $region28: #{tpu_custom_call.1} parent=0 // pred_region
    _
  $region29: #{tpu_custom_call.1} parent=0 // pred_fallthru
    _
  // Predicated region
  $region30: #{tpu_custom_call.1} parent=0 // pred_check
    _
  $region31: #{tpu_custom_call.1} parent=0 // pred_check_branch
    %30 = sbr.rel (0) target = $region33
  $region32: #{tpu_custom_call.1} parent=0 // pred_region
    _
  $region33: #{tpu_custom_call.1} parent=0 // pred_fallthru
    _
  // Predicated region
  $region34: #{tpu_custom_call.1} parent=0 // pred_check
    _
  $region35: #{tpu_custom_call.1} parent=0 // pred_check_branch
    %32 = sbr.rel (0) target = $region37
  $region36: #{tpu_custom_call.1} parent=0 // pred_region
    _
  $region37: #{tpu_custom_call.1} parent=0 // pred_fallthru
    _
  %v33 = vld [vmem:[%s0] sm:$0x3]
  %v34 = vld [vmem:[%s2] sm:$0xff]
  %v35 = vld [vmem:[%s1] sm:$0x3]
  %v36 = vld [vmem:[%s3] sm:$0xf]
  %vm37 = vcmask 31744
  %v39 = vsel %vm37, %v35, 0
  %vm41 = vcmask 1043456
  %v43 = vsel %vm41, %v36, 0
  %45 = vmatprep.subr.mxu0 0.0
  %46 = vmatpush1.msra.mxu0 %v43
  %47 = vmatprep.subr.mxu0 0.0
  %48 = vmatpush1.msra.mxu0 0.0
  %49 = vmatprep.subr.mxu0 0.0
  %50 = vmatpush1.msra.mxu0 0.0
  %51 = vmatprep.subr.mxu0 0.0
  %52 = vmatpush1.msra.mxu0 0.0
  %53 = vmatprep.subr.mxu0 0.0
  %54 = vmatpush1.msra.mxu0 0.0
  %55 = vmatprep.subr.mxu0 0.0
  %56 = vmatpush1.msra.mxu0 0.0
  %57 = vmatprep.subr.mxu0 0.0
  %58 = vmatpush1.msra.mxu0 0.0
  %59 = vmatprep.subr.mxu0 0.0
  %60 = vmatpush1.msra.mxu0 0.0
  %61 = vmatprep.subr.mxu0 0.0
  %62 = vmatpush1.msra.mxu0 0.0
  %63 = vmatprep.subr.mxu0 0.0
  %64 = vmatpush1.msra.mxu0 0.0
  %65 = vmatprep.subr.mxu0 0.0
  %66 = vmatpush1.msra.mxu0 0.0
  %67 = vmatprep.subr.mxu0 0.0
  %68 = vmatpush1.msra.mxu0 0.0
  %69 = vmatprep.subr.mxu0 0.0
  %70 = vmatpush1.msra.mxu0 0.0
  %71 = vmatprep.subr.mxu0 0.0
  %72 = vmatpush1.msra.mxu0 0.0
  %73 = vmatprep.subr.mxu0 0.0
  %74 = vmatpush1.msra.mxu0 0.0
  %75 = vmatprep.subr.mxu0 0.0
  %76 = vmatpush1.msra.mxu0 0.0
  %77 = vmatprep.subr.mxu0 0.0
  %78 = vmatpush1.msra.mxu0 0.0
  %79 = vmatprep.subr.mxu0 0.0
  %80 = vmatpush1.msra.mxu0 0.0
  %81 = vmatprep.subr.mxu0 0.0
  %82 = vmatpush1.msra.mxu0 0.0
  %83 = vmatprep.subr.mxu0 0.0
  %84 = vmatpush1.msra.mxu0 0.0
  %85 = vmatprep.subr.mxu0 0.0
  %86 = vmatpush1.msra.mxu0 0.0
  %87 = vmatprep.subr.mxu0 0.0
  %88 = vmatpush1.msra.mxu0 0.0
  %89 = vmatprep.subr.mxu0 0.0
  %90 = vmatpush1.msra.mxu0 0.0
  %91 = vmatprep.subr.mxu0 0.0
  %92 = vmatpush1.msra.mxu0 0.0
  %93 = vmatprep.subr.mxu0 0.0
  %94 = vmatpush1.msra.mxu0 0.0
  %95 = vmatprep.subr.mxu0 0.0
  %96 = vmatpush1.msra.mxu0 0.0
  %97 = vmatprep.subr.mxu0 0.0
  %98 = vmatpush1.msra.mxu0 0.0
  %99 = vmatprep.subr.mxu0 0.0
  %100 = vmatpush1.msra.mxu0 0.0
  %101 = vmatprep.subr.mxu0 0.0
  %102 = vmatpush1.msra.mxu0 0.0
  %103 = vmatprep.subr.mxu0 0.0
  %104 = vmatpush1.msra.mxu0 0.0
  %105 = vmatprep.subr.mxu0 0.0
  %106 = vmatpush1.msra.mxu0 0.0
  %107 = vmatprep.subr.mxu0 0.0
  %108 = vmatpush1.msra.mxu0 0.0
  %109 = vmatprep.mubr.f32.mxu0 0.0
  %110 = vmatmul.mubr.f32.gmra.mrb[0].mxu0 %v39
  %v111 = vpop.f32.mrb[0].mxu0
  %v112 = vadd.f32 0.0, %v111
  %v113 = vpop.f32.mrb[0].mxu0
  %114 = vdwg.mxu0
  %vm115 = vcmask 64512
  %v117 = vsel %vm115, %v33, 0
  %119 = vmatprep.subr.mxu0 0.0
  %120 = vmatpush1.msra.mxu0 %v34
  %121 = vmatprep.subr.mxu0 0.0
  %122 = vmatpush1.msra.mxu0 0.0
  %123 = vmatprep.subr.mxu0 0.0
  %124 = vmatpush1.msra.mxu0 0.0
  %125 = vmatprep.subr.mxu0 0.0
  %126 = vmatpush1.msra.mxu0 0.0
  %127 = vmatprep.subr.mxu0 0.0
  %128 = vmatpush1.msra.mxu0 0.0
  %129 = vmatprep.subr.mxu0 0.0
  %130 = vmatpush1.msra.mxu0 0.0
  %131 = vmatprep.subr.mxu0 0.0
  %132 = vmatpush1.msra.mxu0 0.0
  %133 = vmatprep.subr.mxu0 0.0
  %134 = vmatpush1.msra.mxu0 0.0
  %135 = vmatprep.subr.mxu0 0.0
  %136 = vmatpush1.msra.mxu0 0.0
  %137 = vmatprep.subr.mxu0 0.0
  %138 = vmatpush1.msra.mxu0 0.0
  %139 = vmatprep.subr.mxu0 0.0
  %140 = vmatpush1.msra.mxu0 0.0
  %141 = vmatprep.subr.mxu0 0.0
  %142 = vmatpush1.msra.mxu0 0.0
  %143 = vmatprep.subr.mxu0 0.0
  %144 = vmatpush1.msra.mxu0 0.0
  %145 = vmatprep.subr.mxu0 0.0
  %146 = vmatpush1.msra.mxu0 0.0
  %147 = vmatprep.subr.mxu0 0.0
  %148 = vmatpush1.msra.mxu0 0.0
  %149 = vmatprep.subr.mxu0 0.0
  %150 = vmatpush1.msra.mxu0 0.0
  %151 = vmatprep.subr.mxu0 0.0
  %152 = vmatpush1.msra.mxu0 0.0
  %153 = vmatprep.subr.mxu0 0.0
  %154 = vmatpush1.msra.mxu0 0.0
  %155 = vmatprep.subr.mxu0 0.0
  %156 = vmatpush1.msra.mxu0 0.0
  %157 = vmatprep.subr.mxu0 0.0
  %158 = vmatpush1.msra.mxu0 0.0
  %159 = vmatprep.subr.mxu0 0.0
  %160 = vmatpush1.msra.mxu0 0.0
  %161 = vmatprep.subr.mxu0 0.0
  %162 = vmatpush1.msra.mxu0 0.0
  %163 = vmatprep.subr.mxu0 0.0
  %164 = vmatpush1.msra.mxu0 0.0
  %165 = vmatprep.subr.mxu0 0.0
  %166 = vmatpush1.msra.mxu0 0.0
  %167 = vmatprep.subr.mxu0 0.0
  %168 = vmatpush1.msra.mxu0 0.0
  %169 = vmatprep.subr.mxu0 0.0
  %170 = vmatpush1.msra.mxu0 0.0
  %171 = vmatprep.subr.mxu0 0.0
  %172 = vmatpush1.msra.mxu0 0.0
  %173 = vmatprep.subr.mxu0 0.0
  %174 = vmatpush1.msra.mxu0 0.0
  %175 = vmatprep.subr.mxu0 0.0
  %176 = vmatpush1.msra.mxu0 0.0
  %177 = vmatprep.subr.mxu0 0.0
  %178 = vmatpush1.msra.mxu0 0.0
  %179 = vmatprep.subr.mxu0 0.0
  %180 = vmatpush1.msra.mxu0 0.0
  %181 = vmatprep.subr.mxu0 0.0
  %182 = vmatpush1.msra.mxu0 0.0
  %183 = vmatprep.mubr.f32.mxu0 0.0
  %184 = vmatmul.mubr.f32.gmra.mrb[0].mxu0 %v117
  %v185 = vpop.f32.mrb[0].mxu0
  %v186 = vadd.f32 %v112, %v185
  %v187 = vpop.f32.mrb[0].mxu0
  %188 = vdwg.mxu0
  %v189 = vld [vmem:[%s4] sm:$0x1]
  %v191 = vlaneseq
  %v192 = vshrl.u32 %v191, 7
  %v193 = vsub.s32 0, %v192
  %v194 = vrot.slane %v189, %v193
  %v196 = vadd.f32 %v186, %v194
  %v197 = vmax.f32 %v196, 0.0
  %v198 = vld [vmem:[%s5] sm:$0xff]
  %v199 = vld [vmem:[%s5 + $0x8] sm:$0xff]
  %v200 = vld [vmem:[%s5 + $0x10] sm:$0xff]
  %v201 = vld [vmem:[%s5 + $0x18] sm:$0xff]
  %v202 = vld [vmem:[%s6] sm:$0x1]
  %v204 = vlaneseq
  %v205 = vshrl.u32 %v204, 7
  %v206 = vsub.s32 0, %v205
  %v207 = vrot.slane %v202, %v206
  %vm209 = vcmask 261120
  %v211 = vsel %vm209, %v197, 0
  %213 = vmatprep.subr.mxu0 0.0
  %214 = vmatpush1.msra.mxu0 %v198
  %215 = vmatprep.subr.mxu0 0.0
  %216 = vmatpush1.msra.mxu0 %v199
  %217 = vmatprep.subr.mxu0 0.0
  %218 = vmatpush1.msra.mxu0 %v200
  %219 = vmatprep.subr.mxu0 0.0
  %220 = vmatpush1.msra.mxu0 %v201
  %221 = vmatprep.subr.mxu0 0.0
  %222 = vmatpush1.msra.mxu0 0.0
  %223 = vmatprep.subr.mxu0 0.0
  %224 = vmatpush1.msra.mxu0 0.0
  %225 = vmatprep.subr.mxu0 0.0
  %226 = vmatpush1.msra.mxu0 0.0
  %227 = vmatprep.subr.mxu0 0.0
  %228 = vmatpush1.msra.mxu0 0.0
  %229 = vmatprep.subr.mxu0 0.0
  %230 = vmatpush1.msra.mxu0 0.0
  %231 = vmatprep.subr.mxu0 0.0
  %232 = vmatpush1.msra.mxu0 0.0
  %233 = vmatprep.subr.mxu0 0.0
  %234 = vmatpush1.msra.mxu0 0.0
  %235 = vmatprep.subr.mxu0 0.0
  %236 = vmatpush1.msra.mxu0 0.0
  %237 = vmatprep.subr.mxu0 0.0
  %238 = vmatpush1.msra.mxu0 0.0
  %239 = vmatprep.subr.mxu0 0.0
  %240 = vmatpush1.msra.mxu0 0.0
  %241 = vmatprep.subr.mxu0 0.0
  %242 = vmatpush1.msra.mxu0 0.0
  %243 = vmatprep.subr.mxu0 0.0
  %244 = vmatpush1.msra.mxu0 0.0
  %245 = vmatprep.subr.mxu0 0.0
  %246 = vmatpush1.msra.mxu0 0.0
  %247 = vmatprep.subr.mxu0 0.0
  %248 = vmatpush1.msra.mxu0 0.0
  %249 = vmatprep.subr.mxu0 0.0
  %250 = vmatpush1.msra.mxu0 0.0
  %251 = vmatprep.subr.mxu0 0.0
  %252 = vmatpush1.msra.mxu0 0.0
  %253 = vmatprep.subr.mxu0 0.0
  %254 = vmatpush1.msra.mxu0 0.0
  %255 = vmatprep.subr.mxu0 0.0
  %256 = vmatpush1.msra.mxu0 0.0
  %257 = vmatprep.subr.mxu0 0.0
  %258 = vmatpush1.msra.mxu0 0.0
  %259 = vmatprep.subr.mxu0 0.0
  %260 = vmatpush1.msra.mxu0 0.0
  %261 = vmatprep.subr.mxu0 0.0
  %262 = vmatpush1.msra.mxu0 0.0
  %263 = vmatprep.subr.mxu0 0.0
  %264 = vmatpush1.msra.mxu0 0.0
  %265 = vmatprep.subr.mxu0 0.0
  %266 = vmatpush1.msra.mxu0 0.0
  %267 = vmatprep.subr.mxu0 0.0
  %268 = vmatpush1.msra.mxu0 0.0
  %269 = vmatprep.subr.mxu0 0.0
  %270 = vmatpush1.msra.mxu0 0.0
  %271 = vmatprep.subr.mxu0 0.0
  %272 = vmatpush1.msra.mxu0 0.0
  %273 = vmatprep.subr.mxu0 0.0
  %274 = vmatpush1.msra.mxu0 0.0
  %275 = vmatprep.subr.mxu0 0.0
  %276 = vmatpush1.msra.mxu0 0.0
  %277 = vmatprep.mubr.f32.mxu0 0.0
  %278 = vmatmul.mubr.f32.gmra.mrb[0].mxu0 %v211
  %v279 = vpop.f32.mrb[0].mxu0
  %v280 = vadd.f32 %v207, %v279
  %v281 = vpop.f32.mrb[0].mxu0
  %282 = vdwg.mxu0
  %v283 = vmax.f32 %v280, 0.0
  %v284 = vld [vmem:[%s7] sm:$0xff]
  %v285 = vld [vmem:[%s7 + $0x8] sm:$0xff]
  %v286 = vld [vmem:[%s7 + $0x10] sm:$0xff]
  %v287 = vld [vmem:[%s7 + $0x18] sm:$0xff]
  %s288 = sld [smem:[#allocation2]]
  %v289 = vstv %s288
  %v291 = vsel %vm209, %v283, 0
  %293 = vmatprep.subr.mxu0 0.0
  %294 = vmatpush1.msra.mxu0 %v284
  %295 = vmatprep.subr.mxu0 0.0
  %296 = vmatpush1.msra.mxu0 %v285
  %297 = vmatprep.subr.mxu0 0.0
  %298 = vmatpush1.msra.mxu0 %v286
  %299 = vmatprep.subr.mxu0 0.0
  %300 = vmatpush1.msra.mxu0 %v287
  %301 = vmatprep.subr.mxu0 0.0
  %302 = vmatpush1.msra.mxu0 0.0
  %303 = vmatprep.subr.mxu0 0.0
  %304 = vmatpush1.msra.mxu0 0.0
  %305 = vmatprep.subr.mxu0 0.0
  %306 = vmatpush1.msra.mxu0 0.0
  %307 = vmatprep.subr.mxu0 0.0
  %308 = vmatpush1.msra.mxu0 0.0
  %309 = vmatprep.subr.mxu0 0.0
  %310 = vmatpush1.msra.mxu0 0.0
  %311 = vmatprep.subr.mxu0 0.0
  %312 = vmatpush1.msra.mxu0 0.0
  %313 = vmatprep.subr.mxu0 0.0
  %314 = vmatpush1.msra.mxu0 0.0
  %315 = vmatprep.subr.mxu0 0.0
  %316 = vmatpush1.msra.mxu0 0.0
  %317 = vmatprep.subr.mxu0 0.0
  %318 = vmatpush1.msra.mxu0 0.0
  %319 = vmatprep.subr.mxu0 0.0
  %320 = vmatpush1.msra.mxu0 0.0
  %321 = vmatprep.subr.mxu0 0.0
  %322 = vmatpush1.msra.mxu0 0.0
  %323 = vmatprep.subr.mxu0 0.0
  %324 = vmatpush1.msra.mxu0 0.0
  %325 = vmatprep.subr.mxu0 0.0
  %326 = vmatpush1.msra.mxu0 0.0
  %327 = vmatprep.subr.mxu0 0.0
  %328 = vmatpush1.msra.mxu0 0.0
  %329 = vmatprep.subr.mxu0 0.0
  %330 = vmatpush1.msra.mxu0 0.0
  %331 = vmatprep.subr.mxu0 0.0
  %332 = vmatpush1.msra.mxu0 0.0
  %333 = vmatprep.subr.mxu0 0.0
  %334 = vmatpush1.msra.mxu0 0.0
  %335 = vmatprep.subr.mxu0 0.0
  %336 = vmatpush1.msra.mxu0 0.0
  %337 = vmatprep.subr.mxu0 0.0
  %338 = vmatpush1.msra.mxu0 0.0
  %339 = vmatprep.subr.mxu0 0.0
  %340 = vmatpush1.msra.mxu0 0.0
  %341 = vmatprep.subr.mxu0 0.0
  %342 = vmatpush1.msra.mxu0 0.0
  %343 = vmatprep.subr.mxu0 0.0
  %344 = vmatpush1.msra.mxu0 0.0
  %345 = vmatprep.subr.mxu0 0.0
  %346 = vmatpush1.msra.mxu0 0.0
  %347 = vmatprep.subr.mxu0 0.0
  %348 = vmatpush1.msra.mxu0 0.0
  %349 = vmatprep.subr.mxu0 0.0
  %350 = vmatpush1.msra.mxu0 0.0
  %351 = vmatprep.subr.mxu0 0.0
  %352 = vmatpush1.msra.mxu0 0.0
  %353 = vmatprep.subr.mxu0 0.0
  %354 = vmatpush1.msra.mxu0 0.0
  %355 = vmatprep.subr.mxu0 0.0
  %356 = vmatpush1.msra.mxu0 0.0
  %357 = vmatprep.mubr.f32.mxu0 0.0
  %358 = vmatmul.mubr.f32.gmra.mrb[0].mxu0 %v291
  %v359 = vpop.f32.mrb[0].mxu0
  %v360 = vadd.f32 %v289, %v359
  %v361 = vpop.f32.mrb[0].mxu0
  %362 = vdwg.mxu0
  %vm363 = vcmask 1024
  %364 = vst.msk [vmem:[%s9] sm:$0x3] %vm363, %v360
  // Predicated region
  $region38: #{tpu_custom_call.1} parent=0 // pred_check
    _
  $region39: #{tpu_custom_call.1} parent=0 // pred_check_branch
    %366 = sbr.rel (0) target = $region41
  $region40: #{tpu_custom_call.1} parent=0 // pred_region
    _
  $region41: #{tpu_custom_call.1} parent=0 // pred_fallthru
    _
  // Predicated region
  $region42: #{tpu_custom_call.1} parent=0 // pred_check
    _
  $region43: #{tpu_custom_call.1} parent=0 // pred_check_branch
    %368 = sbr.rel (0) target = $region45
  $region44: #{tpu_custom_call.1} parent=0 // pred_region
    _
  $region45: #{tpu_custom_call.1} parent=0 // pred_fallthru
    _

</llo_original>
